<compile_context>
chip_gen: v6e
topology: v6e:2x2x1
jax: 0.10.0
libtpu: 0.0.40
codegen_flags: <defaults>
</compile_context>

<pallas_src>
import math

import jax
import jax.numpy as jnp
from jax.experimental import pallas as pl
from jax.experimental.pallas import tpu as pltpu


def _round_up(x: int, m: int) -> int:
    return ((x + m - 1) // m) * m


# --------------------------------------------------------------------------- #
# Kernel
# --------------------------------------------------------------------------- #
def ffn_kernel(x_ref, w1_ref, b1_ref, w2_ref, b2_ref, o_ref):
    j = pl.program_id(1)

    @pl.when(j == 0)
    def _():
        # Output tile is VMEM-resident across the whole F loop (same block
        # index for every j): use it as the accumulator, seeded with b2 so
        # no epilogue bias-add is needed.
        o_ref[...] = jnp.broadcast_to(b2_ref[...], o_ref.shape)

    # linear_1 (this F tile): cast x to bf16 in-kernel, MXU matmul, f32 acc.
    x_bf16 = x_ref[...].astype(jnp.bfloat16)
    h = jnp.dot(x_bf16, w1_ref[...], preferred_element_type=jnp.float32)
    # bias + ReLU in f32 (VPU epilogue, co-issues under the MXU)
    h = jnp.maximum(h + b1_ref[...], 0.0)
    # TODO(synk): training-mode dropout would need pltpu.prng_seed +
    #             pltpu.prng_random_bits with 1/(1-p) scaling (per-(i,j) seed
    #             for grid invariance); eval mode is identity.

    # linear_2 accumulated over F tiles directly into the f32 output tile.
    o_ref[...] += jnp.dot(
        h.astype(jnp.bfloat16), w2_ref[...], preferred_element_type=jnp.float32
    )


# --------------------------------------------------------------------------- #
# Wrapper
# --------------------------------------------------------------------------- #
def prepare_ffn_params(w1, b1, w2, b2):
    """Pad + cast the weights ONCE (hoisted out of the per-call path).

    w1: [E, F], b1: [F], w2: [F, E], b2: [E]  (x @ W layout).
    """
    E, F = w1.shape
    Ep = _round_up(E, 128)
    Fp = _round_up(F, 128)
    return dict(
        w1=jnp.pad(w1, ((0, Ep - E), (0, Fp - F))).astype(jnp.bfloat16),
        w2=jnp.pad(w2, ((0, Fp - F), (0, Ep - E))).astype(jnp.bfloat16),
        b1=jnp.pad(b1, (0, Fp - F)).reshape(1, Fp).astype(jnp.float32),
        b2=jnp.pad(b2, (0, Ep - E)).reshape(1, Ep).astype(jnp.float32),
        E=E, F=F, Ep=Ep, Fp=Fp,
    )


def _tpu_defaults():
    """Generation-aware tile / VMEM defaults (safe fallback for unknown)."""
    try:
        kind = jax.devices()[0].device_kind.lower()
    except Exception:  # pragma: no cover
        kind = ""
    if "v6" in kind:
        # 128 MiB VMEM, bf16 ridge ~650 flops/B -> big M tiles.
        return dict(tm=1024, tf=1024, vmem=96 << 20, two_tc=False)
    if "v7" in kind:
        # 64 MiB VMEM per TC, 2 TCs -> smaller tiles, keep headroom, split M.
        return dict(tm=512, tf=512, vmem=52 << 20, two_tc=True)
    if "v5" in kind:
        # ridge ~240 flops/B -> tm=512 already compute-bound.
        return dict(tm=512, tf=512, vmem=96 << 20, two_tc=False)
    return dict(tm=512, tf=512, vmem=48 << 20, two_tc=False)


def _vmem_estimate(tm, tf, ep):
    """Rough resident-VMEM bytes for the chosen tiles (double-buffered)."""
    x_buf = 2 * tm * ep * 4          # f32 x tile, 2-buf
    w_buf = 2 * (ep * tf + tf * ep) * 2  # bf16 w1 + w2 tiles, 2-buf
    out_buf = 2 * tm * ep * 4        # f32 output/accumulator tile
    h_tmp = tm * tf * 4              # intermediate activation
    bias = 2 * (tf + ep) * 4
    return x_buf + w_buf + out_buf + h_tmp + bias


def ffn_forward(x, params, *, tm=None, tf=None, vmem_limit_bytes=None):
    """x: [B, S, E] float32 -> [B, S, E] float32 (eval-mode FFN)."""
    B, S, E = x.shape
    assert E == params["E"]
    F = params["F"]
    Ep, Fp = params["Ep"], params["Fp"]
    M = B * S

    defaults = _tpu_defaults()
    tm = defaults["tm"] if tm is None else tm
    tf = defaults["tf"] if tf is None else tf
    vmem_limit_bytes = defaults["vmem"] if vmem_limit_bytes is None else vmem_limit_bytes
    two_tc = defaults["two_tc"]

    # Soft VMEM-budget clamp (matters only for very large E): halve tiles
    # until the double-buffered working set fits the requested limit.
    while _vmem_estimate(tm, tf, Ep) > int(0.85 * vmem_limit_bytes):
        if tf >= tm and tf > 256:
            tf //= 2
        elif tm > 256:
            tm //= 2
        elif tf > 256:
            tf //= 2
        else:
            break

    # Clamp to the (padded) problem size; keep lane/sublane alignment.
    tf = min(tf, Fp)                        # multiple of 128
    tm = min(tm, _round_up(M, 8))           # multiple of 8
    if two_tc and M > 8 and tm >= M:
        # Guarantee >=2 M tiles so the "parallel" axis shards across both TCs.
        tm = max(8, _round_up((M + 1) // 2, 8))
    Mp = _round_up(M, tm)

    # Pad x only (f32, no cast — cast happens in-kernel).
    x2d = jnp.pad(x.reshape(M, E), ((0, Mp - M), (0, Ep - E)))

    grid = (Mp // tm, Fp // tf)

    grid_spec = pltpu.PrefetchScalarGridSpec(
        num_scalar_prefetch=0,
        grid=grid,
        in_specs=[
            pl.BlockSpec((tm, Ep), lambda i, j: (i, 0)),   # x tile (f32)
            pl.BlockSpec((Ep, tf), lambda i, j: (0, j)),   # w1 F-tile (bf16)
            pl.BlockSpec((1, tf), lambda i, j: (0, j)),    # b1 F-tile
            pl.BlockSpec((tf, Ep), lambda i, j: (j, 0)),   # w2 F-tile (bf16)
            pl.BlockSpec((1, Ep), lambda i, j: (0, 0)),    # b2
        ],
        out_specs=pl.BlockSpec((tm, Ep), lambda i, j: (i, 0)),
    )

    num_m_tiles = grid[0]
    flops = 2 * M * E * F + 2 * M * F * E
    bytes_accessed = (
        Mp * Ep * 4                                     # x read (f32)
        + num_m_tiles * (params["w1"].size + params["w2"].size) * 2  # weights per M tile
        + params["b1"].size * 4 + params["b2"].size * 4
        + Mp * Ep * 4                                   # output writeback
    )

    out2d = pl.pallas_call(
        ffn_kernel,
        out_shape=jax.ShapeDtypeStruct((Mp, Ep), jnp.float32),
        grid_spec=grid_spec,
        compiler_params=pltpu.CompilerParams(
            dimension_semantics=("parallel", "arbitrary"),
            vmem_limit_bytes=vmem_limit_bytes,
        ),
        cost_estimate=pl.CostEstimate(
            flops=flops, transcendentals=0, bytes_accessed=bytes_accessed
        ),
    )(x2d, params["w1"], params["b1"], params["w2"], params["b2"])

    return out2d[:M, :E].reshape(B, S, E)


# --------------------------------------------------------------------------- #
# Params init (matches nn.Linear default U(-1/sqrt(fan_in), 1/sqrt(fan_in)))
# --------------------------------------------------------------------------- #
def init_ffn_params(key, emb_dim, d_ff):
    k1, k2, k3, k4 = jax.random.split(key, 4)
    lim1 = 1.0 / math.sqrt(emb_dim)
    lim2 = 1.0 / math.sqrt(d_ff)
    # stored as [in, out] (transpose of torch's [out, in]) so kernel uses x @ W
    w1 = jax.random.uniform(k1, (emb_dim, d_ff), jnp.float32, -lim1, lim1)
    b1 = jax.random.uniform(k2, (d_ff,), jnp.float32, -lim1, lim1)
    w2 = jax.random.uniform(k3, (d_ff, emb_dim), jnp.float32, -lim2, lim2)
    b2 = jax.random.uniform(k4, (emb_dim,), jnp.float32, -lim2, lim2)
    return w1, b1, w2, b2


if __name__ == "__main__":
    B, S, emb_dim, d_ff = 2, 8, 32, 64
    dropout_p = 0.1  # eval-mode: identity

    key = jax.random.PRNGKey(0)
    kx, kp = jax.random.split(key)
    x = jax.random.normal(kx, (B, S, emb_dim), dtype=jnp.float32)
    w1, b1, w2, b2 = init_ffn_params(kp, emb_dim, d_ff)

    params = prepare_ffn_params(w1, b1, w2, b2)   # pad + bf16 cast, once
    out = ffn_forward(x, params)
    out = jax.block_until_ready(out)
    assert out.shape == (B, S, emb_dim)

    # Reference following the same bf16-matmul / f32-accumulate numerics.
    xb = x.reshape(B * S, emb_dim).astype(jnp.bfloat16)
    ref_h = jnp.maximum(
        jnp.dot(xb, w1.astype(jnp.bfloat16), preferred_element_type=jnp.float32) + b1,
        0.0,
    )
    ref = (
        jnp.dot(ref_h.astype(jnp.bfloat16), w2.astype(jnp.bfloat16),
                preferred_element_type=jnp.float32) + b2
    ).reshape(B, S, emb_dim)
    assert jnp.allclose(out, ref, atol=1e-3, rtol=1e-3)

    # Sanity vs. pure-f32 math (looser: bf16 matmul inputs lose mantissa).
    ref_f32 = jnp.maximum(x @ w1 + b1, 0.0) @ w2 + b2
    assert jnp.allclose(out, ref_f32, atol=5e-2, rtol=5e-2)

    print("KERNEL_OK")
</pallas_src>

<mosaic_0001>
module attributes {stable_mosaic.version = 11 : i64} {
  func.func @ffn_kernel(%arg0: i32, %arg1: i32, %arg2: memref<16x128xf32, #tpu.memory_space<vmem>>, %arg3: memref<128x128xbf16, #tpu.memory_space<vmem>>, %arg4: memref<1x128xf32, #tpu.memory_space<vmem>>, %arg5: memref<128x128xbf16, #tpu.memory_space<vmem>>, %arg6: memref<1x128xf32, #tpu.memory_space<vmem>>, %arg7: memref<16x128xf32, #tpu.memory_space<vmem>>) attributes {dimension_semantics = [#tpu.dimension_semantics<parallel>, #tpu.dimension_semantics<arbitrary>], iteration_bounds = array<i64: 1, 1>, scalar_prefetch = 0 : i64, scratch_operands = 0 : i64, tpu.core_type = #tpu.core_type<tc>, window_params = [{transform_indices = @transform_0, window_bounds = array<i64: 16, 128>}, {transform_indices = @transform_1, window_bounds = array<i64: 128, 128>}, {transform_indices = @transform_2, window_bounds = array<i64: 1, 128>}, {transform_indices = @transform_3, window_bounds = array<i64: 128, 128>}, {pipeline_mode = #tpu.pipeline_mode<synchronous>, transform_indices = @transform_4, window_bounds = array<i64: 1, 128>}, {transform_indices = @transform_5, window_bounds = array<i64: 16, 128>}]} {
    %c0_i32 = arith.constant 0 : i32
    %0 = arith.cmpi eq, %arg1, %c0_i32 : i32
    %1 = arith.extui %0 : i1 to i32
    %c0_i32_0 = arith.constant 0 : i32
    %2 = arith.cmpi ne, %1, %c0_i32_0 : i32
    scf.if %2 {
      %c0_14 = arith.constant 0 : index
      %c0_15 = arith.constant 0 : index
      %18 = vector.load %arg6[%c0_14, %c0_15] : memref<1x128xf32, #tpu.memory_space<vmem>>, vector<1x128xf32>
      %19 = vector.shape_cast %18 : vector<1x128xf32> to vector<1x128xf32>
      %20 = vector.broadcast %19 : vector<1x128xf32> to vector<16x128xf32>
      %c0_16 = arith.constant 0 : index
      %c0_17 = arith.constant 0 : index
      %21 = vector.load %arg7[%c0_16, %c0_17] : memref<16x128xf32, #tpu.memory_space<vmem>>, vector<16x128xf32>
      tpu.vector_store %arg7[%c0_16, %c0_17], %20 {strides = array<i32>} : memref<16x128xf32, #tpu.memory_space<vmem>>, vector<16x128xf32>,
    } else {
    }
    %c0 = arith.constant 0 : index
    %c0_1 = arith.constant 0 : index
    %3 = vector.load %arg2[%c0, %c0_1] : memref<16x128xf32, #tpu.memory_space<vmem>>, vector<16x128xf32>
    %4 = arith.truncf %3 : vector<16x128xf32> to vector<16x128xbf16>
    %c0_2 = arith.constant 0 : index
    %c0_3 = arith.constant 0 : index
    %5 = vector.load %arg3[%c0_2, %c0_3] : memref<128x128xbf16, #tpu.memory_space<vmem>>, vector<128x128xbf16>
    %cst = arith.constant dense<0.000000e+00> : vector<16x128xf32>
    %6 = tpu.matmul %4, %5, %cst {dimension_numbers = #tpu.dot_dimension_numbers<[1], [0], [0], [1], [0, 0, 1, 1], [], []>} : vector<16x128xbf16>, vector<128x128xbf16>, vector<16x128xf32> -> vector<16x128xf32>
    %c0_4 = arith.constant 0 : index
    %c0_5 = arith.constant 0 : index
    %7 = vector.load %arg4[%c0_4, %c0_5] : memref<1x128xf32, #tpu.memory_space<vmem>>, vector<1x128xf32>
    %8 = vector.broadcast %7 : vector<1x128xf32> to vector<16x128xf32>
    %9 = arith.addf %6, %8 : vector<16x128xf32>
    %cst_6 = arith.constant 0.000000e+00 : f32
    %10 = vector.broadcast %cst_6 : f32 to vector<16x128xf32>
    %11 = arith.maximumf %9, %10 : vector<16x128xf32>
    %c0_7 = arith.constant 0 : index
    %c0_8 = arith.constant 0 : index
    %12 = vector.load %arg7[%c0_7, %c0_8] : memref<16x128xf32, #tpu.memory_space<vmem>>, vector<16x128xf32>
    %13 = arith.truncf %11 : vector<16x128xf32> to vector<16x128xbf16>
    %c0_9 = arith.constant 0 : index
    %c0_10 = arith.constant 0 : index
    %14 = vector.load %arg5[%c0_9, %c0_10] : memref<128x128xbf16, #tpu.memory_space<vmem>>, vector<128x128xbf16>
    %cst_11 = arith.constant dense<0.000000e+00> : vector<16x128xf32>
    %15 = tpu.matmul %13, %14, %cst_11 {dimension_numbers = #tpu.dot_dimension_numbers<[1], [0], [0], [1], [0, 0, 1, 1], [], []>} : vector<16x128xbf16>, vector<128x128xbf16>, vector<16x128xf32> -> vector<16x128xf32>
    %16 = arith.addf %12, %15 : vector<16x128xf32>
    %c0_12 = arith.constant 0 : index
    %c0_13 = arith.constant 0 : index
    %17 = vector.load %arg7[%c0_12, %c0_13] : memref<16x128xf32, #tpu.memory_space<vmem>>, vector<16x128xf32>
    tpu.vector_store %arg7[%c0_12, %c0_13], %16 {strides = array<i32>} : memref<16x128xf32, #tpu.memory_space<vmem>>, vector<16x128xf32>,
    return
  }
  func.func @transform_0(%arg0: i32, %arg1: i32) -> (i32, i32) {
    %c0_i32 = arith.constant 0 : i32
    %c0_i32_0 = arith.constant 0 : i32
    return %arg0, %c0_i32 : i32, i32
  }
  func.func @transform_1(%arg0: i32, %arg1: i32) -> (i32, i32) {
    %c0_i32 = arith.constant 0 : i32
    %c0_i32_0 = arith.constant 0 : i32
    return %c0_i32, %arg1 : i32, i32
  }
  func.func @transform_2(%arg0: i32, %arg1: i32) -> (i32, i32) {
    %c0_i32 = arith.constant 0 : i32
    %c0_i32_0 = arith.constant 0 : i32
    return %c0_i32, %arg1 : i32, i32
  }
  func.func @transform_3(%arg0: i32, %arg1: i32) -> (i32, i32) {
    %c0_i32 = arith.constant 0 : i32
    %c0_i32_0 = arith.constant 0 : i32
    return %arg1, %c0_i32 : i32, i32
  }
  func.func @transform_4(%arg0: i32, %arg1: i32) -> (i32, i32) {
    %c0_i32 = arith.constant 0 : i32
    %c0_i32_0 = arith.constant 0 : i32
    %c0_i32_1 = arith.constant 0 : i32
    return %c0_i32, %c0_i32_0 : i32, i32
  }
  func.func @transform_5(%arg0: i32, %arg1: i32) -> (i32, i32) {
    %c0_i32 = arith.constant 0 : i32
    %c0_i32_0 = arith.constant 0 : i32
    return %arg0, %c0_i32 : i32, i32
  }
}

</mosaic_0001>

<llo_original>
// kernel: tpu_custom_call.1
$region0: #{tpu_custom_call.1}
  #allocation0 [shape = 'u32[]', space=smem, size = 0x4, offset = 0x4, fixed_abs, tag = 'smem constant byte address 0x4 - core index']
  #allocation1 [shape = 'u32[144,128]{1,0:T(1,128)}', space=vmem, size = 0x12000, scoped, tag = 'internal scratch']
  %s0 = inlined_call_operand.hbm [shape: f32[16,128], index: 0, kind: input, shape index: {}]
  %s1 = inlined_call_operand.hbm [shape: bf16[128,128], index: 1, kind: input, shape index: {}]
  %s2 = inlined_call_operand.vmem [shape: f32[1,128], index: 2, kind: input, shape index: {}]
  %s3 = inlined_call_operand.hbm [shape: bf16[128,128], index: 3, kind: input, shape index: {}]
  %s4 = inlined_call_operand.vmem [shape: f32[1,128], index: 4, kind: input, shape index: {}]
  %s5 = inlined_call_operand.hbm [shape: f32[16,128], index: 5, kind: output, shape index: {}]
  %s6 = sld [smem:[#allocation0]]
  $region46: #{tpu_custom_call.1} parent=0
    _
  %s8 = ssub.s32 1, %s6
  %s9 = scalar_select 0, %s8, %s6
  $region1: #{tpu_custom_call.1} parent=0
    #allocation2 [shape = 'u8[8192]{0}', space=vmem, size = 0x2000, scoped, tag = 'input window, operand 0, single buffered']
    #allocation3 [shape = 's32[1]{0}', space=sflag, size = 0x4, scoped, tag = 'scoped memory for tpu_custom_call.1']
    #allocation4 [shape = 's32[1]{0}', space=sflag, size = 0x4, scoped, tag = 'scoped memory for tpu_custom_call.1']
    #allocation5 [shape = 'u8[32768]{0}', space=vmem, size = 0x8000, scoped, tag = 'input window, operand 1, single buffered']
    #allocation6 [shape = 's32[1]{0}', space=sflag, size = 0x4, scoped, tag = 'scoped memory for tpu_custom_call.1']
    #allocation7 [shape = 'u8[32768]{0}', space=vmem, size = 0x8000, scoped, tag = 'input window, operand 3, single buffered']
    #allocation8 [shape = 'u8[8192]{0}', space=vmem, size = 0x2000, scoped, tag = 'output window, operand 0, single buffered']
    %10 = vsyncpa [#allocation3], 0
    %11 = vsyncpa [#allocation6], 0
    %12 = vsyncpa [#allocation4], 0
    // Predicated region
    $region2: #{tpu_custom_call.1} parent=1 // pred_check
      _
    $region3: #{tpu_custom_call.1} parent=1 // pred_check_branch
      %14 = sbr.rel (0) target = $region5
    $region4: #{tpu_custom_call.1} parent=1 // pred_region
      %s16 = ssub.s32 256, 256
      %17 = vsyncadd [#allocation3], %s16
      %s18 = sshll.u32 [#allocation2], 4
      %s19 = int_to_ptr.vmem [resolvable:$true] %s18
      %24 = dma.hbm_to_vmem [thread:$0]  %s0, 256, %s19, [#allocation3], 128, 128, 8
    $region5: #{tpu_custom_call.1} parent=1 // pred_fallthru
      _
    // Predicated region
    $region6: #{tpu_custom_call.1} parent=1 // pred_check
      _
    $region7: #{tpu_custom_call.1} parent=1 // pred_check_branch
      %26 = sbr.rel (0) target = $region9
    $region8: #{tpu_custom_call.1} parent=1 // pred_region
      %s28 = ssub.s32 1024, 1024
      %29 = vsyncadd [#allocation6], %s28
      %s30 = sshll.u32 [#allocation5], 4
      %s31 = int_to_ptr.vmem [resolvable:$true] %s30
      %36 = dma.hbm_to_vmem [thread:$0]  %s1, 1024, %s31, [#allocation6], 64, 64, 4
    $region9: #{tpu_custom_call.1} parent=1 // pred_fallthru
      _
    // Predicated region
    $region10: #{tpu_custom_call.1} parent=1 // pred_check
      _
    $region11: #{tpu_custom_call.1} parent=1 // pred_check_branch
      %38 = sbr.rel (0) target = $region13
    $region12: #{tpu_custom_call.1} parent=1 // pred_region
      _
    $region13: #{tpu_custom_call.1} parent=1 // pred_fallthru
      _
    // Predicated region
    $region14: #{tpu_custom_call.1} parent=1 // pred_check
      _
    $region15: #{tpu_custom_call.1} parent=1 // pred_check_branch
      %40 = sbr.rel (0) target = $region17
    $region16: #{tpu_custom_call.1} parent=1 // pred_region
      %s42 = ssub.s32 1024, 1024
      %43 = vsyncadd [#allocation6], %s42
      %s44 = sshll.u32 [#allocation7], 4
      %s45 = int_to_ptr.vmem [resolvable:$true] %s44
      %50 = dma.hbm_to_vmem [thread:$0]  %s3, 1024, %s45, [#allocation6], 64, 64, 4
    $region17: #{tpu_custom_call.1} parent=1 // pred_fallthru
      _
    // Predicated region
    $region18: #{tpu_custom_call.1} parent=1 // pred_check
      _
    $region19: #{tpu_custom_call.1} parent=1 // pred_check_branch
      %52 = sbr.rel (0) target = $region21
    $region20: #{tpu_custom_call.1} parent=1 // pred_region
      _
    $region21: #{tpu_custom_call.1} parent=1 // pred_fallthru
      _
    // Predicated region
    $region22: #{tpu_custom_call.1} parent=1 // pred_check
      _
    $region23: #{tpu_custom_call.1} parent=1 // pred_check_branch
      %54 = sbr.rel (0) target = $region25
    $region24: #{tpu_custom_call.1} parent=1 // pred_region
      %55 = dma.done [#allocation3], 256
    $region25: #{tpu_custom_call.1} parent=1 // pred_fallthru
      _
    // Predicated region
    $region26: #{tpu_custom_call.1} parent=1 // pred_check
      _
    $region27: #{tpu_custom_call.1} parent=1 // pred_check_branch
      %57 = sbr.rel (0) target = $region29
    $region28: #{tpu_custom_call.1} parent=1 // pred_region
      %58 = dma.done [#allocation6], 1024
    $region29: #{tpu_custom_call.1} parent=1 // pred_fallthru
      _
    // Predicated region
    $region30: #{tpu_custom_call.1} parent=1 // pred_check
      _
    $region31: #{tpu_custom_call.1} parent=1 // pred_check_branch
      %60 = sbr.rel (0) target = $region33
    $region32: #{tpu_custom_call.1} parent=1 // pred_region
      %61 = dma.done [#allocation6], 1024
    $region33: #{tpu_custom_call.1} parent=1 // pred_fallthru
      _
    %p63 = scmp.eq.s32.totalorder 0, 0
    // Predicated region
    $region34: #{tpu_custom_call.1} parent=1 // pred_check
      %p64 = pneg %p63
    $region35: #{tpu_custom_call.1} parent=1 // pred_check_branch
      %66 = sbr.rel (%p64) target = $region37
    $region36: #{tpu_custom_call.1} parent=1 // pred_region
      %v67 = vld [vmem:[%s4] sm:$0x1]
      %v69 = vlaneseq
      %v70 = vshrl.u32 %v69, 7
      %v71 = vsub.s32 0, %v70
      %v72 = vrot.slane %v67, %v71
      %74 = vst [vmem:[#allocation8] sm:$0xff] %v72
      %75 = vst [vmem:[#allocation8 + $0x8] sm:$0xff] %v72
    $region37: #{tpu_custom_call.1} parent=1 // pred_fallthru
      _
    %v76 = vld [vmem:[#allocation2] sm:$0xff]
    %v77 = vld [vmem:[#allocation2 + $0x8] sm:$0xff]
    %v78 = vpack.c.bf16 %v77, %v76
    %v79 = vld [vmem:[#allocation5] sm:$0xf]
    %v80 = vld [vmem:[#allocation5 + $0x4] sm:$0xf]
    %v81 = vld [vmem:[#allocation5 + $0x8] sm:$0xf]
    %v82 = vld [vmem:[#allocation5 + $0xc] sm:$0xf]
    %v83 = vld [vmem:[#allocation5 + $0x10] sm:$0xf]
    %v84 = vld [vmem:[#allocation5 + $0x14] sm:$0xf]
    %v85 = vld [vmem:[#allocation5 + $0x18] sm:$0xf]
    %v86 = vld [vmem:[#allocation5 + $0x1c] sm:$0xf]
    %v87 = vld [vmem:[#allocation5 + $0x20] sm:$0xf]
    %v88 = vld [vmem:[#allocation5 + $0x24] sm:$0xf]
    %v89 = vld [vmem:[#allocation5 + $0x28] sm:$0xf]
    %v90 = vld [vmem:[#allocation5 + $0x2c] sm:$0xf]
    %v91 = vld [vmem:[#allocation5 + $0x30] sm:$0xf]
    %v92 = vld [vmem:[#allocation5 + $0x34] sm:$0xf]
    %v93 = vld [vmem:[#allocation5 + $0x38] sm:$0xf]
    %v94 = vld [vmem:[#allocation5 + $0x3c] sm:$0xf]
    %v95 = vld [vmem:[%s2] sm:$0x1]
    %v97 = vlaneseq
    %v98 = vshrl.u32 %v97, 7
    %v99 = vsub.s32 0, %v98
    %v100 = vrot.slane %v95, %v99
    %v118 = vunpack.c.l.b16 %v79
    %v119 = vunpack.c.l.b16 %v80
    %v120 = vunpack.c.l.b16 %v81
    %v121 = vunpack.c.l.b16 %v82
    %v122 = vunpack.c.l.b16 %v83
    %v123 = vunpack.c.l.b16 %v84
    %v124 = vunpack.c.l.b16 %v85
    %v125 = vunpack.c.l.b16 %v86
    %v126 = vunpack.c.l.b16 %v87
    %v127 = vunpack.c.l.b16 %v88
    %v128 = vunpack.c.l.b16 %v89
    %v129 = vunpack.c.l.b16 %v90
    %v130 = vunpack.c.l.b16 %v91
    %v131 = vunpack.c.l.b16 %v92
    %v132 = vunpack.c.l.b16 %v93
    %v133 = vunpack.c.l.b16 %v94
    %v134 = vpack.c.b16 %v119, %v118
    %v135 = vpack.c.b16 %v121, %v120
    %v136 = vpack.c.b16 %v123, %v122
    %v137 = vpack.c.b16 %v125, %v124
    %v138 = vpack.c.b16 %v127, %v126
    %v139 = vpack.c.b16 %v129, %v128
    %v140 = vpack.c.b16 %v131, %v130
    %v141 = vpack.c.b16 %v133, %v132
    %150 = vmatprep.subr.bf16.mxu0 0
    %151 = vmatpush1.bf16.msra.mxu0 %v141
    %152 = vmatprep.subr.bf16.mxu0 0
    %153 = vmatpush1.bf16.msra.mxu0 %v140
    %154 = vmatprep.subr.bf16.mxu0 0
    %155 = vmatpush1.bf16.msra.mxu0 %v139
    %156 = vmatprep.subr.bf16.mxu0 0
    %157 = vmatpush1.bf16.msra.mxu0 %v138
    %158 = vmatprep.subr.bf16.mxu0 0
    %159 = vmatpush1.bf16.msra.mxu0 %v137
    %160 = vmatprep.subr.bf16.mxu0 0
    %161 = vmatpush1.bf16.msra.mxu0 %v136
    %162 = vmatprep.subr.bf16.mxu0 0
    %163 = vmatpush1.bf16.msra.mxu0 %v135
    %164 = vmatprep.subr.bf16.mxu0 0
    %165 = vmatpush1.bf16.msra.mxu0 %v134
    %166 = vmatprep.subr.bf16.mxu0 0
    %167 = vmatpush2.bf16.msra.mxu0 0
    %168 = vmatprep.subr.bf16.mxu0 0
    %169 = vmatpush2.bf16.msra.mxu0 0
    %170 = vmatprep.subr.bf16.mxu0 0
    %171 = vmatpush2.bf16.msra.mxu0 0
    %172 = vmatprep.subr.bf16.mxu0 0
    %173 = vmatpush2.bf16.msra.mxu0 0
    %174 = vmatprep.subr.bf16.mxu0 0
    %175 = vmatpush2.bf16.msra.mxu0 0
    %176 = vmatprep.subr.bf16.mxu0 0
    %177 = vmatpush2.bf16.msra.mxu0 0
    %178 = vmatprep.subr.bf16.mxu0 0
    %179 = vmatpush2.bf16.msra.mxu0 0
    %180 = vmatprep.subr.bf16.mxu0 0
    %181 = vmatpush2.bf16.msra.mxu0 0
    %182 = vmatprep.mubr.bf16.mxu0 0
    %183 = vmatmul.mubr.bf16.gmra.mxu0 %v78
    %v184 = vpop.f32.mrf.mxu0
    %v185 = vadd.f32 %v100, %v184
    %v186 = vpop.f32.mrf.mxu0
    %v187 = vpop.f32.mrf.mxu0
    %v188 = vadd.f32 %v100, %v187
    %v189 = vpop.f32.mrf.mxu0
    %190 = vdwg.mxu0
    %v191 = vmax.f32 %v185, 0.0
    %v192 = vmax.f32 %v188, 0.0
    %v193 = vld [vmem:[#allocation8] sm:$0xff]
    %v194 = vld [vmem:[#allocation8 + $0x8] sm:$0xff]
    %v195 = vpack.c.bf16 %v192, %v191
    %v196 = vld [vmem:[#allocation7] sm:$0xf]
    %v197 = vld [vmem:[#allocation7 + $0x4] sm:$0xf]
    %v198 = vld [vmem:[#allocation7 + $0x8] sm:$0xf]
    %v199 = vld [vmem:[#allocation7 + $0xc] sm:$0xf]
    %v200 = vld [vmem:[#allocation7 + $0x10] sm:$0xf]
    %v201 = vld [vmem:[#allocation7 + $0x14] sm:$0xf]
    %v202 = vld [vmem:[#allocation7 + $0x18] sm:$0xf]
    %v203 = vld [vmem:[#allocation7 + $0x1c] sm:$0xf]
    %v204 = vld [vmem:[#allocation7 + $0x20] sm:$0xf]
    %v205 = vld [vmem:[#allocation7 + $0x24] sm:$0xf]
    %v206 = vld [vmem:[#allocation7 + $0x28] sm:$0xf]
    %v207 = vld [vmem:[#allocation7 + $0x2c] sm:$0xf]
    %v208 = vld [vmem:[#allocation7 + $0x30] sm:$0xf]
    %v209 = vld [vmem:[#allocation7 + $0x34] sm:$0xf]
    %v210 = vld [vmem:[#allocation7 + $0x38] sm:$0xf]
    %v211 = vld [vmem:[#allocation7 + $0x3c] sm:$0xf]
    %v228 = vunpack.c.l.b16 %v196
    %v229 = vunpack.c.l.b16 %v197
    %v230 = vunpack.c.l.b16 %v198
    %v231 = vunpack.c.l.b16 %v199
    %v232 = vunpack.c.l.b16 %v200
    %v233 = vunpack.c.l.b16 %v201
    %v234 = vunpack.c.l.b16 %v202
    %v235 = vunpack.c.l.b16 %v203
    %v236 = vunpack.c.l.b16 %v204
    %v237 = vunpack.c.l.b16 %v205
    %v238 = vunpack.c.l.b16 %v206
    %v239 = vunpack.c.l.b16 %v207
    %v240 = vunpack.c.l.b16 %v208
    %v241 = vunpack.c.l.b16 %v209
    %v242 = vunpack.c.l.b16 %v210
    %v243 = vunpack.c.l.b16 %v211
    %v244 = vpack.c.b16 %v229, %v228
    %v245 = vpack.c.b16 %v231, %v230
    %v246 = vpack.c.b16 %v233, %v232
    %v247 = vpack.c.b16 %v235, %v234
    %v248 = vpack.c.b16 %v237, %v236
    %v249 = vpack.c.b16 %v239, %v238
    %v250 = vpack.c.b16 %v241, %v240
    %v251 = vpack.c.b16 %v243, %v242
    %260 = vmatprep.subr.bf16.mxu0 0
    %261 = vmatpush1.bf16.msra.mxu0 %v251
    %262 = vmatprep.subr.bf16.mxu0 0
    %263 = vmatpush1.bf16.msra.mxu0 %v250
    %264 = vmatprep.subr.bf16.mxu0 0
    %265 = vmatpush1.bf16.msra.mxu0 %v249
    %266 = vmatprep.subr.bf16.mxu0 0
    %267 = vmatpush1.bf16.msra.mxu0 %v248
    %268 = vmatprep.subr.bf16.mxu0 0
    %269 = vmatpush1.bf16.msra.mxu0 %v247
    %270 = vmatprep.subr.bf16.mxu0 0
    %271 = vmatpush1.bf16.msra.mxu0 %v246
    %272 = vmatprep.subr.bf16.mxu0 0
    %273 = vmatpush1.bf16.msra.mxu0 %v245
    %274 = vmatprep.subr.bf16.mxu0 0
    %275 = vmatpush1.bf16.msra.mxu0 %v244
    %276 = vmatprep.subr.bf16.mxu0 0
    %277 = vmatpush2.bf16.msra.mxu0 0
    %278 = vmatprep.subr.bf16.mxu0 0
    %279 = vmatpush2.bf16.msra.mxu0 0
    %280 = vmatprep.subr.bf16.mxu0 0
    %281 = vmatpush2.bf16.msra.mxu0 0
    %282 = vmatprep.subr.bf16.mxu0 0
    %283 = vmatpush2.bf16.msra.mxu0 0
    %284 = vmatprep.subr.bf16.mxu0 0
    %285 = vmatpush2.bf16.msra.mxu0 0
    %286 = vmatprep.subr.bf16.mxu0 0
    %287 = vmatpush2.bf16.msra.mxu0 0
    %288 = vmatprep.subr.bf16.mxu0 0
    %289 = vmatpush2.bf16.msra.mxu0 0
    %290 = vmatprep.subr.bf16.mxu0 0
    %291 = vmatpush2.bf16.msra.mxu0 0
    %292 = vmatprep.mubr.bf16.mxu0 0
    %293 = vmatmul.mubr.bf16.gmra.mxu0 %v195
    %v294 = vpop.f32.mrf.mxu0
    %v295 = vadd.f32 0.0, %v294
    %v296 = vpop.f32.mrf.mxu0
    %v297 = vpop.f32.mrf.mxu0
    %v298 = vadd.f32 0.0, %v297
    %v299 = vpop.f32.mrf.mxu0
    %300 = vdwg.mxu0
    %v301 = vadd.f32 %v193, %v295
    %v302 = vadd.f32 %v194, %v298
    %303 = vst [vmem:[#allocation8] sm:$0xff] %v301
    %304 = vst [vmem:[#allocation8 + $0x8] sm:$0xff] %v302
    // Predicated region
    $region38: #{tpu_custom_call.1} parent=1 // pred_check
      _
    $region39: #{tpu_custom_call.1} parent=1 // pred_check_branch
      %306 = sbr.rel (0) target = $region41
    $region40: #{tpu_custom_call.1} parent=1 // pred_region
      %s308 = ssub.s32 256, 256
      %309 = vsyncadd [#allocation4], %s308
      %s310 = sshll.u32 [#allocation8], 4
      %s311 = int_to_ptr.vmem [resolvable:$true] %s310
      %316 = dma.vmem_to_hbm [thread:$0]  %s311, 256, %s5, [#allocation4], 128, 128, 8
    $region41: #{tpu_custom_call.1} parent=1 // pred_fallthru
      _
    // Predicated region
    $region42: #{tpu_custom_call.1} parent=1 // pred_check
      _
    $region43: #{tpu_custom_call.1} parent=1 // pred_check_branch
      %318 = sbr.rel (0) target = $region45
    $region44: #{tpu_custom_call.1} parent=1 // pred_region
      %319 = dma.done [#allocation4], 256
    $region45: #{tpu_custom_call.1} parent=1 // pred_fallthru
      _
    %320 = vsyncpa [#allocation3], 1
    %321 = vsyncpa [#allocation6], 1
    %322 = vsyncpa [#allocation4], 1

</llo_original>
